<compile_context>
chip_gen: v7x
topology: tpu7x:2x2x1
jax: 0.10.0
libtpu: 0.0.40
codegen_flags: <defaults>
</compile_context>

<pallas_src>
import functools

import jax
import jax.numpy as jnp
from jax import lax
from jax.experimental import pallas as pl
from jax.experimental.pallas import tpu as pltpu

BN_EPS = 1e-5  # nn.BatchNorm2d default


def _conv_stats_kernel(x_ref, w_ref, conv_ref, stats_ref, *, th, wc):
    """One (batch, row-tile) grid step: in-VMEM im2col + conv + BN partials.

    x_ref    : (1, H+2, (W+2)*Cin) f32     zero-padded row-flattened NHWC image
    w_ref    : (3, (W+2)*Cin, W*Cout) bf16 banded (Toeplitz) weight, 1 slab / ky
    conv_ref : (1, th, W*Cout) bf16        conv output tile (lane-dense)
    stats_ref: (1, 1, 2, W*Cout) f32       per-tile [sum, sum of squares] / lane
    """
    r = pl.program_id(1)
    row0 = r * th
    if th % 8 == 0:
        row0 = pl.multiple_of(row0, 8)
    # Superband of th+2 padded rows (8-aligned dynamic start); the 3 vertical
    # taps are static sublane shifts of it -- no HBM im2col, no masked lanes.
    sband = x_ref[0, pl.ds(row0, th + 2), :]
    acc = jnp.zeros((th, wc), jnp.float32)
    for ky in range(3):  # unrolled: 3 bf16 MXU matmuls, f32 accumulation
        band = sband[ky:ky + th, :].astype(jnp.bfloat16)
        acc = acc + jnp.dot(band, w_ref[ky], preferred_element_type=jnp.float32)
    conv_ref[...] = acc.reshape(1, th, wc).astype(conv_ref.dtype)
    # Per-tile BN partials from the f32 accumulator (cross-sublane XLU reduce).
    s1 = jnp.sum(acc, axis=0, keepdims=True)
    s2 = jnp.sum(acc * acc, axis=0, keepdims=True)
    stats_ref[...] = jnp.concatenate([s1, s2], axis=0).reshape(1, 1, 2, wc)


def _bn_relu_kernel(conv_ref, scale_ref, shift_ref, out_ref):
    """y = relu(conv * scale + shift); fully lane-dense, single fused pass."""
    y = conv_ref[...].astype(jnp.float32) * scale_ref[...] + shift_ref[...]
    out_ref[...] = jnp.maximum(y, 0.0).astype(out_ref.dtype)


def _banded_conv_weight(w_oihw, W):
    """(Cout, Cin, 3, 3) -> (3, (W+2)*Cin, W*Cout) banded slabs T_ky with
    T_ky[(w + kx)*Cin + ci, w*Cout + co] = w[co, ci, ky, kx]."""
    Cout, Cin, KH, KW = w_oihw.shape
    eye_w = jnp.eye(W, dtype=jnp.float32)
    slabs = []
    for ky in range(KH):
        t = jnp.zeros(((W + KW - 1) * Cin, W * Cout), jnp.float32)
        for kx in range(KW):
            blk = jnp.kron(eye_w, w_oihw[:, :, ky, kx].T.astype(jnp.float32))
            t = t + jnp.pad(blk, ((kx * Cin, (KW - 1 - kx) * Cin), (0, 0)))
        slabs.append(t)
    return jnp.stack(slabs)


def _vmem_limit_bytes():
    cap = 128 * 1024 * 1024
    try:  # generation-aware: v7x TensorCores only have 64 MiB of VMEM
        cap = int(pltpu.get_tpu_info().vmem_capacity_bytes)
    except Exception:
        pass
    return int(min(cap * 3 // 4, 96 * 1024 * 1024))


def conv_batch_norm(x_nchw, w_oihw, bias, gamma, beta, *, row_tile=None):
    """Conv2d(3x3, padding=1) -> BatchNorm2d (train-mode batch stats) -> ReLU.

    Input/output follow the PyTorch NCHW convention.
    """
    N, Cin, H, W = x_nchw.shape
    Cout = w_oihw.shape[0]
    Hp, Wp = H + 2, W + 2
    WpC, WC = Wp * Cin, W * Cout
    M = N * H * W

    # Conv bias cancels exactly under training-mode BatchNorm -> drop it.
    del bias

    # Zero-pad and flatten each padded row to (W+2)*Cin lanes.  The raw input
    # (~4*Cin B/pixel) is now the only conv-input HBM stream; the 9x f32
    # im2col blow-up of the previous version is gone.
    # TODO(synk): fold the NCHW->NHWC relayout + pad into the phase-1 pipeline
    # (in-kernel XLU relayout) to drop these two small XLA passes over x.
    x_nhwc = jnp.transpose(x_nchw, (0, 2, 3, 1))
    x_rows = jnp.pad(x_nhwc, ((0, 0), (1, 1), (1, 1), (0, 0)))
    x_rows = x_rows.reshape(N, Hp, WpC).astype(jnp.float32)

    # Banded (Toeplitz) weight, bf16: one (WpC, WC) slab per vertical tap so a
    # whole output row-band is 3 lane-dense MXU matmuls, no in-kernel gather.
    # TODO(synk): for large W / large channel counts switch to per-tap
    # (Cin x Cout) matmul accumulation (the banded weight grows with W).
    w_band = _banded_conv_weight(w_oihw, W).astype(jnp.bfloat16)

    # --- generation-aware row-tile selection (honest per-step VMEM bytes) ---
    vmem_limit = _vmem_limit_bytes()

    def phase1_bytes(th):
        img = 2 * Hp * WpC * 4            # padded image, f32, double-buffered
        wgt = 2 * 3 * WpC * WC * 2        # banded weight, bf16, double-buffered
        cnv = 2 * th * WC * 2             # conv out tile, bf16, double-buffered
        sts = 2 * 2 * WC * 4              # stats tile, f32, double-buffered
        tmp = ((th + 2) * WpC * 4         # superband
               + 3 * th * WpC * 2         # shifted bf16 bands
               + 3 * th * WC * 4)         # acc, acc*acc, dot results
        return img + wgt + cnv + sts + tmp

    if row_tile is None:
        cands = [d for d in range(8, H + 1, 8) if H % d == 0] or [H]
        fits = [d for d in cands if phase1_bytes(d) <= vmem_limit // 2] or [cands[0]]
        busy = [d for d in fits if N * (H // d) >= 4]   # keep both v7x TCs fed
        TH = max(busy) if busy else max(fits)
    else:
        TH = row_tile
    R = H // TH

    cparams = pltpu.CompilerParams(
        dimension_semantics=("parallel", "parallel"),
        vmem_limit_bytes=vmem_limit)

    # ---- Phase 1: fused im2col + conv matmuls + per-tile BN partials ----
    conv_d, stats = pl.pallas_call(
        functools.partial(_conv_stats_kernel, th=TH, wc=WC),
        grid=(N, R),
        in_specs=[
            # Full padded image per batch element; block index is constant in
            # r, so it is DMA'd once per image and revisited across row-tiles.
            pl.BlockSpec((1, Hp, WpC), lambda n, r: (n, 0, 0)),
            pl.BlockSpec((3, WpC, WC), lambda n, r: (0, 0, 0)),
        ],
        out_specs=[
            pl.BlockSpec((1, TH, WC), lambda n, r: (n, r, 0)),
            pl.BlockSpec((1, 1, 2, WC), lambda n, r: (n, r, 0, 0)),
        ],
        out_shape=[
            jax.ShapeDtypeStruct((N, H, WC), jnp.bfloat16),
            jax.ShapeDtypeStruct((N, R, 2, WC), jnp.float32),
        ],
        compiler_params=cparams,
    )(x_rows, w_band)

    # ---- Tiny cross-tile combine + BN folding (pure JAX) ----
    tot = jnp.sum(stats, axis=(0, 1)).reshape(2, W, Cout).sum(axis=1)  # (2, Cout)
    mean = tot[0] / M
    var = jnp.maximum(tot[1] / M - mean * mean, 0.0)   # biased var (train mode)
    # TODO(synk): at large M switch to mean-shifted / compensated per-tile
    # partials to avoid E[x^2]-E[x]^2 cancellation.
    inv_std = lax.rsqrt(var + BN_EPS)
    scale = gamma.astype(jnp.float32) * inv_std
    shift = beta.astype(jnp.float32) - mean * scale
    scale_d = jnp.tile(scale, W).reshape(1, 1, WC)     # lane index = w*Cout + co
    shift_d = jnp.tile(shift, W).reshape(1, 1, WC)

    # ---- Phase 2: y = relu(conv*scale + shift), lane-dense ----
    out_d = pl.pallas_call(
        _bn_relu_kernel,
        grid=(N, R),
        in_specs=[
            pl.BlockSpec((1, TH, WC), lambda n, r: (n, r, 0)),
            pl.BlockSpec((1, 1, WC), lambda n, r: (0, 0, 0)),
            pl.BlockSpec((1, 1, WC), lambda n, r: (0, 0, 0)),
        ],
        out_specs=pl.BlockSpec((1, TH, WC), lambda n, r: (n, r, 0)),
        out_shape=jax.ShapeDtypeStruct((N, H, WC), x_nchw.dtype),
        compiler_params=cparams,
    )(conv_d, scale_d, shift_d)

    # TODO(synk): fold this NHWC->NCHW relayout into phase-2 out_specs
    # ((1, Cout, TH*W) blocks + in-kernel XLU transpose) to drop one XLA pass.
    return jnp.transpose(out_d.reshape(N, H, W, Cout), (0, 3, 1, 2))


def _reference(x_nchw, w_oihw, bias, gamma, beta):
    """Pure-JAX reference matching PyTorch semantics (training-mode BN)."""
    out = lax.conv_general_dilated(
        x_nchw.astype(jnp.float32), w_oihw.astype(jnp.float32),
        window_strides=(1, 1), padding=((1, 1), (1, 1)),
        dimension_numbers=("NCHW", "OIHW", "NCHW"))
    out = out + bias.reshape(1, -1, 1, 1)
    mean = jnp.mean(out, axis=(0, 2, 3), keepdims=True)
    var = jnp.mean((out - mean) ** 2, axis=(0, 2, 3), keepdims=True)
    out = (out - mean) * lax.rsqrt(var + BN_EPS)
    out = out * gamma.reshape(1, -1, 1, 1) + beta.reshape(1, -1, 1, 1)
    return jnp.maximum(out, 0.0)


if __name__ == "__main__":
    # ConvBatchNorm(in_channels=4, out_channels=8), input (2, 4, 16, 16)
    N, Cin, Cout, H, W = 2, 4, 8, 16, 16

    key = jax.random.PRNGKey(0)
    kx, kw, kb = jax.random.split(key, 3)

    x = jax.random.normal(kx, (N, Cin, H, W), dtype=jnp.float32)
    w = jax.random.normal(kw, (Cout, Cin, 3, 3), dtype=jnp.float32) * 0.1
    b = jax.random.normal(kb, (Cout,), dtype=jnp.float32) * 0.1
    gamma = jnp.ones((Cout,), dtype=jnp.float32)   # BN weight init
    beta = jnp.zeros((Cout,), dtype=jnp.float32)   # BN bias init

    fn = jax.jit(conv_batch_norm)   # auto tile pick -> TH=8, 2x2 grid here
    out = jax.block_until_ready(fn(x, w, b, gamma, beta))

    ref = _reference(x, w, b, gamma, beta)
    assert out.shape == (N, Cout, H, W), out.shape
    # bf16 matmul operands + bf16 conv intermediate -> ~1e-2 level error.
    assert jnp.allclose(out, ref, atol=5e-2, rtol=5e-2), \
        float(jnp.max(jnp.abs(out - ref)))

    print("KERNEL_OK")
</pallas_src>

<mosaic_0001>
module attributes {stable_mosaic.version = 11 : i64} {
  func.func @_conv_stats_kernel(%arg0: i32, %arg1: i32, %arg2: memref<1x18x72xf32, #tpu.memory_space<vmem>>, %arg3: memref<3x72x128xbf16, #tpu.memory_space<vmem>>, %arg4: memref<1x8x128xbf16, #tpu.memory_space<vmem>>, %arg5: memref<1x1x2x128xf32, #tpu.memory_space<vmem>>) attributes {dimension_semantics = [#tpu.dimension_semantics<parallel>, #tpu.dimension_semantics<parallel>], iteration_bounds = array<i64: 2, 2>, scalar_prefetch = 0 : i64, scratch_operands = 0 : i64, tpu.core_type = #tpu.core_type<tc>, window_params = [{transform_indices = @transform_0, window_bounds = array<i64: 1, 18, 72>}, {pipeline_mode = #tpu.pipeline_mode<synchronous>, transform_indices = @transform_1, window_bounds = array<i64: 3, 72, 128>}, {transform_indices = @transform_2, window_bounds = array<i64: 1, 8, 128>}, {transform_indices = @transform_3, window_bounds = array<i64: 1, 1, 2, 128>}]} {
    %c8_i32 = arith.constant 8 : i32
    %0 = arith.muli %arg1, %c8_i32 : i32
    %1 = tpu.assume_multiple %0, 8 : i32
    %c0 = arith.constant 0 : index
    %2 = arith.index_cast %1 : i32 to index
    %c0_0 = arith.constant 0 : index
    %3 = vector.load %arg2[%c0, %2, %c0_0] : memref<1x18x72xf32, #tpu.memory_space<vmem>>, vector<1x10x72xf32>
    %4 = vector.shape_cast %3 : vector<1x10x72xf32> to vector<10x72xf32>
    %cst = arith.constant 0.000000e+00 : f32
    %5 = vector.broadcast %cst : f32 to vector<8x128xf32>
    %6 = vector.extract_strided_slice %4 {offsets = [0, 0], sizes = [8, 72], strides = [1, 1]} : vector<10x72xf32> to vector<8x72xf32>
    %7 = arith.truncf %6 : vector<8x72xf32> to vector<8x72xbf16>
    %c0_1 = arith.constant 0 : index
    %c0_2 = arith.constant 0 : index
    %c0_3 = arith.constant 0 : index
    %8 = vector.load %arg3[%c0_1, %c0_2, %c0_3] : memref<3x72x128xbf16, #tpu.memory_space<vmem>>, vector<1x72x128xbf16>
    %9 = vector.shape_cast %8 : vector<1x72x128xbf16> to vector<72x128xbf16>
    %cst_4 = arith.constant dense<0.000000e+00> : vector<8x128xf32>
    %10 = tpu.matmul %7, %9, %cst_4 {dimension_numbers = #tpu.dot_dimension_numbers<[1], [0], [0], [1], [0, 0, 1, 1], [], []>} : vector<8x72xbf16>, vector<72x128xbf16>, vector<8x128xf32> -> vector<8x128xf32>
    %11 = arith.addf %5, %10 : vector<8x128xf32>
    %12 = vector.extract_strided_slice %4 {offsets = [1, 0], sizes = [8, 72], strides = [1, 1]} : vector<10x72xf32> to vector<8x72xf32>
    %13 = arith.truncf %12 : vector<8x72xf32> to vector<8x72xbf16>
    %c1 = arith.constant 1 : index
    %c0_5 = arith.constant 0 : index
    %c0_6 = arith.constant 0 : index
    %14 = vector.load %arg3[%c1, %c0_5, %c0_6] : memref<3x72x128xbf16, #tpu.memory_space<vmem>>, vector<1x72x128xbf16>
    %15 = vector.shape_cast %14 : vector<1x72x128xbf16> to vector<72x128xbf16>
    %cst_7 = arith.constant dense<0.000000e+00> : vector<8x128xf32>
    %16 = tpu.matmul %13, %15, %cst_7 {dimension_numbers = #tpu.dot_dimension_numbers<[1], [0], [0], [1], [0, 0, 1, 1], [], []>} : vector<8x72xbf16>, vector<72x128xbf16>, vector<8x128xf32> -> vector<8x128xf32>
    %17 = arith.addf %11, %16 : vector<8x128xf32>
    %18 = vector.extract_strided_slice %4 {offsets = [2, 0], sizes = [8, 72], strides = [1, 1]} : vector<10x72xf32> to vector<8x72xf32>
    %19 = arith.truncf %18 : vector<8x72xf32> to vector<8x72xbf16>
    %c2 = arith.constant 2 : index
    %c0_8 = arith.constant 0 : index
    %c0_9 = arith.constant 0 : index
    %20 = vector.load %arg3[%c2, %c0_8, %c0_9] : memref<3x72x128xbf16, #tpu.memory_space<vmem>>, vector<1x72x128xbf16>
    %21 = vector.shape_cast %20 : vector<1x72x128xbf16> to vector<72x128xbf16>
    %cst_10 = arith.constant dense<0.000000e+00> : vector<8x128xf32>
    %22 = tpu.matmul %19, %21, %cst_10 {dimension_numbers = #tpu.dot_dimension_numbers<[1], [0], [0], [1], [0, 0, 1, 1], [], []>} : vector<8x72xbf16>, vector<72x128xbf16>, vector<8x128xf32> -> vector<8x128xf32>
    %23 = arith.addf %17, %22 : vector<8x128xf32>
    %24 = vector.shape_cast %23 : vector<8x128xf32> to vector<1x8x128xf32>
    %25 = arith.truncf %24 : vector<1x8x128xf32> to vector<1x8x128xbf16>
    %c0_11 = arith.constant 0 : index
    %c0_12 = arith.constant 0 : index
    %c0_13 = arith.constant 0 : index
    %26 = vector.load %arg4[%c0_11, %c0_12, %c0_13] : memref<1x8x128xbf16, #tpu.memory_space<vmem>>, vector<1x8x128xbf16>
    tpu.vector_store %arg4[%c0_11, %c0_12, %c0_13], %25 {strides = array<i32>} : memref<1x8x128xbf16, #tpu.memory_space<vmem>>, vector<1x8x128xbf16>,
    %cst_14 = arith.constant dense<0.000000e+00> : vector<128xf32>
    %27 = vector.multi_reduction <add>, %23, %cst_14 [0] : vector<8x128xf32> to vector<128xf32>
    %28 = vector.shape_cast %27 : vector<128xf32> to vector<1x128xf32>
    %29 = arith.mulf %23, %23 : vector<8x128xf32>
    %cst_15 = arith.constant dense<0.000000e+00> : vector<128xf32>
    %30 = vector.multi_reduction <add>, %29, %cst_15 [0] : vector<8x128xf32> to vector<128xf32>
    %31 = vector.shape_cast %30 : vector<128xf32> to vector<1x128xf32>
    %32 = tpu.concatenate %28, %31 in 0 : vector<1x128xf32>, vector<1x128xf32> -> vector<2x128xf32>
    %33 = vector.shape_cast %32 : vector<2x128xf32> to vector<1x1x2x128xf32>
    %c0_16 = arith.constant 0 : index
    %c0_17 = arith.constant 0 : index
    %c0_18 = arith.constant 0 : index
    %c0_19 = arith.constant 0 : index
    %34 = vector.load %arg5[%c0_16, %c0_17, %c0_18, %c0_19] : memref<1x1x2x128xf32, #tpu.memory_space<vmem>>, vector<1x1x2x128xf32>
    tpu.vector_store %arg5[%c0_16, %c0_17, %c0_18, %c0_19], %33 {strides = array<i32>} : memref<1x1x2x128xf32, #tpu.memory_space<vmem>>, vector<1x1x2x128xf32>,
    return
  }
  func.func @transform_0(%arg0: i32, %arg1: i32) -> (i32, i32, i32) {
    %c0_i32 = arith.constant 0 : i32
    %c0_i32_0 = arith.constant 0 : i32
    %c0_i32_1 = arith.constant 0 : i32
    return %arg0, %c0_i32, %c0_i32_0 : i32, i32, i32
  }
  func.func @transform_1(%arg0: i32, %arg1: i32) -> (i32, i32, i32) {
    %c0_i32 = arith.constant 0 : i32
    %c0_i32_0 = arith.constant 0 : i32
    %c0_i32_1 = arith.constant 0 : i32
    %c0_i32_2 = arith.constant 0 : i32
    return %c0_i32, %c0_i32_0, %c0_i32_1 : i32, i32, i32
  }
  func.func @transform_2(%arg0: i32, %arg1: i32) -> (i32, i32, i32) {
    %c0_i32 = arith.constant 0 : i32
    %c0_i32_0 = arith.constant 0 : i32
    return %arg0, %arg1, %c0_i32 : i32, i32, i32
  }
  func.func @transform_3(%arg0: i32, %arg1: i32) -> (i32, i32, i32, i32) {
    %c0_i32 = arith.constant 0 : i32
    %c0_i32_0 = arith.constant 0 : i32
    %c0_i32_1 = arith.constant 0 : i32
    return %arg0, %arg1, %c0_i32, %c0_i32_0 : i32, i32, i32, i32
  }
}

module attributes {stable_mosaic.version = 11 : i64} {
  func.func @_bn_relu_kernel(%arg0: i32, %arg1: i32, %arg2: memref<1x8x128xbf16, #tpu.memory_space<vmem>>, %arg3: memref<1x1x128xf32, #tpu.memory_space<vmem>>, %arg4: memref<1x1x128xf32, #tpu.memory_space<vmem>>, %arg5: memref<1x8x128xf32, #tpu.memory_space<vmem>>) attributes {dimension_semantics = [#tpu.dimension_semantics<parallel>, #tpu.dimension_semantics<parallel>], iteration_bounds = array<i64: 2, 2>, scalar_prefetch = 0 : i64, scratch_operands = 0 : i64, tpu.core_type = #tpu.core_type<tc>, window_params = [{transform_indices = @transform_0, window_bounds = array<i64: 1, 8, 128>}, {pipeline_mode = #tpu.pipeline_mode<synchronous>, transform_indices = @transform_1, window_bounds = array<i64: 1, 1, 128>}, {pipeline_mode = #tpu.pipeline_mode<synchronous>, transform_indices = @transform_2, window_bounds = array<i64: 1, 1, 128>}, {transform_indices = @transform_3, window_bounds = array<i64: 1, 8, 128>}]} {
    %c0 = arith.constant 0 : index
    %c0_0 = arith.constant 0 : index
    %c0_1 = arith.constant 0 : index
    %0 = vector.load %arg2[%c0, %c0_0, %c0_1] : memref<1x8x128xbf16, #tpu.memory_space<vmem>>, vector<1x8x128xbf16>
    %1 = arith.extf %0 : vector<1x8x128xbf16> to vector<1x8x128xf32>
    %c0_2 = arith.constant 0 : index
    %c0_3 = arith.constant 0 : index
    %c0_4 = arith.constant 0 : index
    %2 = vector.load %arg3[%c0_2, %c0_3, %c0_4] : memref<1x1x128xf32, #tpu.memory_space<vmem>>, vector<1x1x128xf32>
    %3 = vector.broadcast %2 : vector<1x1x128xf32> to vector<1x8x128xf32>
    %4 = arith.mulf %1, %3 : vector<1x8x128xf32>
    %c0_5 = arith.constant 0 : index
    %c0_6 = arith.constant 0 : index
    %c0_7 = arith.constant 0 : index
    %5 = vector.load %arg4[%c0_5, %c0_6, %c0_7] : memref<1x1x128xf32, #tpu.memory_space<vmem>>, vector<1x1x128xf32>
    %6 = vector.broadcast %5 : vector<1x1x128xf32> to vector<1x8x128xf32>
    %7 = arith.addf %4, %6 : vector<1x8x128xf32>
    %cst = arith.constant 0.000000e+00 : f32
    %8 = vector.broadcast %cst : f32 to vector<1x8x128xf32>
    %9 = arith.maximumf %7, %8 : vector<1x8x128xf32>
    %c0_8 = arith.constant 0 : index
    %c0_9 = arith.constant 0 : index
    %c0_10 = arith.constant 0 : index
    %10 = vector.load %arg5[%c0_8, %c0_9, %c0_10] : memref<1x8x128xf32, #tpu.memory_space<vmem>>, vector<1x8x128xf32>
    tpu.vector_store %arg5[%c0_8, %c0_9, %c0_10], %9 {strides = array<i32>} : memref<1x8x128xf32, #tpu.memory_space<vmem>>, vector<1x8x128xf32>,
    return
  }
  func.func @transform_0(%arg0: i32, %arg1: i32) -> (i32, i32, i32) {
    %c0_i32 = arith.constant 0 : i32
    %c0_i32_0 = arith.constant 0 : i32
    return %arg0, %arg1, %c0_i32 : i32, i32, i32
  }
  func.func @transform_1(%arg0: i32, %arg1: i32) -> (i32, i32, i32) {
    %c0_i32 = arith.constant 0 : i32
    %c0_i32_0 = arith.constant 0 : i32
    %c0_i32_1 = arith.constant 0 : i32
    %c0_i32_2 = arith.constant 0 : i32
    return %c0_i32, %c0_i32_0, %c0_i32_1 : i32, i32, i32
  }
  func.func @transform_2(%arg0: i32, %arg1: i32) -> (i32, i32, i32) {
    %c0_i32 = arith.constant 0 : i32
    %c0_i32_0 = arith.constant 0 : i32
    %c0_i32_1 = arith.constant 0 : i32
    %c0_i32_2 = arith.constant 0 : i32
    return %c0_i32, %c0_i32_0, %c0_i32_1 : i32, i32, i32
  }
  func.func @transform_3(%arg0: i32, %arg1: i32) -> (i32, i32, i32) {
    %c0_i32 = arith.constant 0 : i32
    %c0_i32_0 = arith.constant 0 : i32
    return %arg0, %arg1, %c0_i32 : i32, i32, i32
  }
}

</mosaic_0001>

<llo_original>
// kernel: tile.13
$region0: #{tile.13}
  #allocation0 [shape = 's32[1]{0}', space=sflag, size = 0x4, scoped, tag = 'scoped memory for tile.13']
  %s0 = inlined_call_operand.vmem [shape: f32[8], index: 0, kind: input, shape index: {}]
  %s1 = inlined_call_operand.vmem [shape: f32[16,8], index: 1, kind: output, shape index: {}]
  // Predicated region
  $region2: #{tile.13} parent=0 // pred_check
    _
  $region3: #{tile.13} parent=0 // pred_check_branch
    %3 = sbr.rel (0) target = $region5
  $region4: #{tile.13} parent=0 // pred_region
    _
  $region5: #{tile.13} parent=0 // pred_fallthru
    _
  %v4 = vld [vmem:[%s0] ss:$0 sm:$0xff]
  %5 = vst [vmem:[%s1] sm:$0xff] %v4
  %s6 = scalar_lea.vmem %s1, 8
  %7 = vst [vmem:[%s6] sm:$0xff] %v4

// kernel: tile.14
$region0: #{tile.14}
  %s0 = inlined_call_operand.vmem [shape: f32[16,8], index: 0, kind: input, shape index: {}]
  %s1 = inlined_call_operand.hbm [shape: f32[1,1,128], index: 1, kind: output, shape index: {}]
  $region1: #{tile.14} parent=0
    #allocation0 [shape = 'u8[512]{0}', space=vmem, size = 0x400, scoped, tag = 'operand span for operand 1']
    #allocation1 [shape = 's32[1]{0}', space=sflag, size = 0x4, scoped, tag = 'scoped memory for tile.14']
    #allocation2 [shape = 'u8[4096]{0}', space=vmem, size = 0x1000, scoped, tag = 'scoped mem for output reshape']
    %2 = vsyncpa [#allocation1], 0
    %v3 = vld [vmem:[%s0] sm:$0x1]
    %vm4 = vcmask 64512
    %5 = vst.msk [vmem:[#allocation2] sm:$0x1] %vm4, %v3
    %s6 = scalar_lea.vmem %s0, 15
    %v7 = vld [vmem:[%s6] sm:$0x1]
    %8 = vrot.lane.b32.xlu0 %v7, 120
    %v9 = vpop.permute.xlu0 %8
    %vm10 = vcmask 1048512
    %11 = vst.msk [vmem:[#allocation2] sm:$0x1] %vm10, %v9
    %s12 = scalar_lea.vmem %s0, 14
    %v13 = vld [vmem:[%s12] sm:$0x1]
    %14 = vrot.lane.b32.xlu0 %v13, 112
    %v15 = vpop.permute.xlu0 %14
    %vm16 = vcmask 982912
    %17 = vst.msk [vmem:[#allocation2] sm:$0x1] %vm16, %v15
    %s18 = scalar_lea.vmem %s0, 13
    %v19 = vld [vmem:[%s18] sm:$0x1]
    %20 = vrot.lane.b32.xlu0 %v19, 104
    %v21 = vpop.permute.xlu0 %20
    %vm22 = vcmask 917312
    %23 = vst.msk [vmem:[#allocation2] sm:$0x1] %vm22, %v21
    %s24 = scalar_lea.vmem %s0, 12
    %v25 = vld [vmem:[%s24] sm:$0x1]
    %26 = vrot.lane.b32.xlu0 %v25, 96
    %v27 = vpop.permute.xlu0 %26
    %vm28 = vcmask 851712
    %29 = vst.msk [vmem:[#allocation2] sm:$0x1] %vm28, %v27
    %s30 = scalar_lea.vmem %s0, 11
    %v31 = vld [vmem:[%s30] sm:$0x1]
    %32 = vrot.lane.b32.xlu0 %v31, 88
    %v33 = vpop.permute.xlu0 %32
    %vm34 = vcmask 786112
    %35 = vst.msk [vmem:[#allocation2] sm:$0x1] %vm34, %v33
    %s36 = scalar_lea.vmem %s0, 10
    %v37 = vld [vmem:[%s36] sm:$0x1]
    %38 = vrot.lane.b32.xlu0 %v37, 80
    %v39 = vpop.permute.xlu0 %38
    %vm40 = vcmask 720512
    %41 = vst.msk [vmem:[#allocation2] sm:$0x1] %vm40, %v39
    %s42 = scalar_lea.vmem %s0, 9
    %v43 = vld [vmem:[%s42] sm:$0x1]
    %44 = vrot.lane.b32.xlu0 %v43, 72
    %v45 = vpop.permute.xlu0 %44
    %vm46 = vcmask 654912
    %47 = vst.msk [vmem:[#allocation2] sm:$0x1] %vm46, %v45
    %s48 = scalar_lea.vmem %s0, 8
    %v49 = vld [vmem:[%s48] sm:$0x1]
    %50 = vrot.lane.b32.xlu0 %v49, 64
    %v51 = vpop.permute.xlu0 %50
    %vm52 = vcmask 589312
    %53 = vst.msk [vmem:[#allocation2] sm:$0x1] %vm52, %v51
    %s54 = scalar_lea.vmem %s0, 7
    %v55 = vld [vmem:[%s54] sm:$0x1]
    %56 = vrot.lane.b32.xlu0 %v55, 56
    %v57 = vpop.permute.xlu0 %56
    %vm58 = vcmask 523712
    %59 = vst.msk [vmem:[#allocation2] sm:$0x1] %vm58, %v57
    %s60 = scalar_lea.vmem %s0, 6
    %v61 = vld [vmem:[%s60] sm:$0x1]
    %62 = vrot.lane.b32.xlu0 %v61, 48
    %v63 = vpop.permute.xlu0 %62
    %vm64 = vcmask 458112
    %65 = vst.msk [vmem:[#allocation2] sm:$0x1] %vm64, %v63
    %s66 = scalar_lea.vmem %s0, 5
    %v67 = vld [vmem:[%s66] sm:$0x1]
    %68 = vrot.lane.b32.xlu0 %v67, 40
    %v69 = vpop.permute.xlu0 %68
    %vm70 = vcmask 392512
    %71 = vst.msk [vmem:[#allocation2] sm:$0x1] %vm70, %v69
    %s72 = scalar_lea.vmem %s0, 4
    %v73 = vld [vmem:[%s72] sm:$0x1]
    %74 = vrot.lane.b32.xlu0 %v73, 32
    %v75 = vpop.permute.xlu0 %74
    %vm76 = vcmask 326912
    %77 = vst.msk [vmem:[#allocation2] sm:$0x1] %vm76, %v75
    %s78 = scalar_lea.vmem %s0, 3
    %v79 = vld [vmem:[%s78] sm:$0x1]
    %80 = vrot.lane.b32.xlu0 %v79, 24
    %v81 = vpop.permute.xlu0 %80
    %vm82 = vcmask 261312
    %83 = vst.msk [vmem:[#allocation2] sm:$0x1] %vm82, %v81
    %s84 = scalar_lea.vmem %s0, 2
    %v85 = vld [vmem:[%s84] sm:$0x1]
    %86 = vrot.lane.b32.xlu0 %v85, 16
    %v87 = vpop.permute.xlu0 %86
    %vm88 = vcmask 195712
    %89 = vst.msk [vmem:[#allocation2] sm:$0x1] %vm88, %v87
    %s90 = scalar_lea.vmem %s0, 1
    %v91 = vld [vmem:[%s90] sm:$0x1]
    %92 = vrot.lane.b32.xlu0 %v91, 8
    %v93 = vpop.permute.xlu0 %92
    %vm94 = vcmask 130112
    %95 = vst.msk [vmem:[#allocation2] sm:$0x1] %vm94, %v93
    %s97 = sshllo.u32 0, 1
    %v99 = vld [vmem:[#allocation2] sm:%s97]
    %s100 = sshllo.u32 0, 1
    %101 = vst [vmem:[#allocation0] sm:%s100] %v99
    %s103 = ssub.s32 16, 16
    %104 = vsyncadd [#allocation1], %s103
    %s106 = sshll.u32 [#allocation0], 4
    %s107 = int_to_ptr.vmem [resolvable:$true] %s106
    %109 = dma.vmem_to_hbm [thread:$0]  %s107, 16, %s1, [#allocation1]
    %110 = dma.done [#allocation1], 16
    %111 = vsyncpa [#allocation1], 1

// kernel: conv_batch_norm.2
$region0: #{conv_batch_norm.2}
  #allocation0 [shape = 'u32[]', space=smem, size = 0x4, offset = 0x4, fixed_abs, tag = 'smem constant byte address 0x4 - core index']
  #allocation1 [shape = 'u32[144,128]{1,0:T(1,128)}', space=vmem, size = 0x12000, scoped, tag = 'internal scratch']
  %s0 = inlined_call_operand.hbm [shape: f32[2,18,72], index: 0, kind: input, shape index: {}]
  %s1 = inlined_call_operand.hbm [shape: bf16[3,72,128], index: 1, kind: input, shape index: {}]
  %s2 = inlined_call_operand.hbm [shape: bf16[2,16,128], index: 2, kind: output, shape index: {0}]
  %s3 = inlined_call_operand.hbm [shape: f32[2,2,2,128], index: 3, kind: output, shape index: {1}]
  %4 = xla_tuple %s2, %s3
  %s5 = sld [smem:[#allocation0]]
  $region57: #{conv_batch_norm.2} parent=0
    _
  %s7 = ssub.s32 1, %s5
  %s8 = scalar_select 0, %s7, %s5
  $region1: #{conv_batch_norm.2} parent=0
    #allocation2 [shape = 'u8[24576]{0}', space=vmem, size = 0x6000, scoped, tag = 'input window, operand 0']
    #allocation3 [shape = 's32[2]{0}', space=sflag, size = 0x8, scoped, tag = 'scoped memory for conv_batch_norm.2']
    #allocation4 [shape = 's32[2]{0}', space=sflag, size = 0x8, scoped, tag = 'scoped memory for conv_batch_norm.2']
    #allocation5 [shape = 'u8[55296]{0}', space=vmem, size = 0xd800, scoped, tag = 'input window, operand 1, single buffered']
    #allocation6 [shape = 's32[1]{0}', space=sflag, size = 0x4, scoped, tag = 'scoped memory for conv_batch_norm.2']
    #allocation7 [shape = 'u8[4096]{0}', space=vmem, size = 0x1000, scoped, tag = 'output window, operand 0']
    #allocation8 [shape = 'u8[2048]{0}', space=vmem, size = 0x800, scoped, tag = 'output window, operand 1']
    #allocation9 [shape = 's32[2]{0}', space=sflag, size = 0x8, scoped, tag = 'scoped memory for conv_batch_norm.2']
    %9 = vsyncpa [#allocation3], 0
    %s10 = scalar_lea.sflag [#allocation3], 1
    %11 = vsyncpa %s10, 0
    %12 = vsyncpa [#allocation6], 0
    %13 = vsyncpa [#allocation4], 0
    %s14 = scalar_lea.sflag [#allocation4], 1
    %15 = vsyncpa %s14, 0
    %16 = vsyncpa [#allocation9], 0
    %s17 = scalar_lea.sflag [#allocation9], 1
    %18 = vsyncpa %s17, 0
    loop: start=0, step=1, limit=6
    $region2: #{conv_batch_norm.2} parent=1 // loop_pre_header
      _
    $region3: #{conv_batch_norm.2} parent=1 // loop_header
      %s20 = sphi 0, %s24
      %p21 = scmp.ge.s32.totalorder %s20, 6
      %s27 = sphi 0, %s39
      %s28 = sphi 0, %s35
      %s29 = sphi 0, %s27
      %s30 = sphi 0, %s28
      %s31 = sphi 0, %s29
      %s32 = sphi 0, %s30
      %s42 = sphi 0, %s44
      %s45 = sphi 0, %s42
      %s46 = sphi 0, %s45
      %s62 = sphi 0, %s46
      %s66 = sphi 0, %s66
      %s68 = sphi 0, %s66
      %s69 = sphi 0, %s68
      %s83 = sphi 0, %s69
      %s91 = sphi 0, %s93
      %s94 = sphi 0, %s91
      %s95 = sphi 0, %s94
      %s111 = sphi 0, %s95
      %s119 = sphi 0, %s121
      %s122 = sphi 0, %s119
      %s123 = sphi 0, %s122
      %s139 = sphi 0, %s123
    $region4: #{conv_batch_norm.2} parent=1 // loop_header_branch
      %23 = sbr.rel (%p21) target = $region8
    $region5: #{conv_batch_norm.2} parent=1 // loop_body
      %s25 = ssub.s32 %s20, 1
      %s26 = ssub.s32 %s20, 2
      %s33 = sadd.s32 1, %s28
      %p34 = scmp.ge.s32.totalorder %s33, 2
      %s35 = scalar_select %p34, 0, %s33
      %s36 = sadd.s32 1, %s27
      %s37 = scalar_select %p34, %s36, %s27
      %p38 = scmp.ge.s32.totalorder %s37, 2
      %s39 = scalar_select %p38, 0, %s37
      %s40 = ssub.s32 %s27, %s39
      %p41 = scmp.eq.s32.totalorder %s40, 0
      %s43 = sadd.s32 %s42, 1
      %s44 = scalar_select %p41, %s42, %s43
      %p47 = pneg %p41
      %p48 = scmp.eq.s32.totalorder %s20, 3
      %p49 = por %p47, %p48
      %p50 = scmp.ne.s32.totalorder %s42, %s45
      %p51 = scmp.eq.s32.totalorder %s20, 0
      %p52 = por %p50, %p51
      %p53 = scmp.ne.s32.totalorder %s42, %s45
      %p54 = scmp.eq.s32.totalorder %s25, 3
      %p55 = por %p53, %p54
      %p56 = scmp.ne.s32.totalorder %s45, %s46
      %p57 = scmp.eq.s32.totalorder %s25, 0
      %p58 = por %p56, %p57
      %p59 = scmp.ne.s32.totalorder %s45, %s46
      %p60 = scmp.eq.s32.totalorder %s26, 3
      %p61 = por %p59, %p60
      %p63 = scmp.ne.s32.totalorder %s46, %s62
      %p64 = scmp.eq.s32.totalorder %s26, 0
      %p65 = por %p63, %p64
      %s67 = sadd.s32 %s66, 1
      %p70 = scmp.eq.s32.totalorder %s20, 3
      %p71 = scmp.ne.s32.totalorder %s66, %s68
      %p72 = scmp.eq.s32.totalorder %s20, 0
      %p73 = por %p71, %p72
      %p74 = scmp.ne.s32.totalorder %s66, %s68
      %p75 = scmp.eq.s32.totalorder %s25, 3
      %p76 = por %p74, %p75
      %p77 = scmp.ne.s32.totalorder %s68, %s69
      %p78 = scmp.eq.s32.totalorder %s25, 0
      %p79 = por %p77, %p78
      %p80 = scmp.ne.s32.totalorder %s68, %s69
      %p81 = scmp.eq.s32.totalorder %s26, 3
      %p82 = por %p80, %p81
      %p84 = scmp.ne.s32.totalorder %s69, %s83
      %p85 = scmp.eq.s32.totalorder %s26, 0
      %p86 = por %p84, %p85
      %s87 = ssub.s32 %s27, %s39
      %s88 = ssub.s32 %s28, %s35
      %s89 = sor.u32 %s87, %s88
      %p90 = scmp.eq.s32.totalorder %s89, 0
      %s92 = sadd.s32 %s91, 1
      %s93 = scalar_select %p90, %s91, %s92
      %p96 = pneg %p90
      %p97 = scmp.eq.s32.totalorder %s20, 3
      %p98 = por %p96, %p97
      %p99 = scmp.ne.s32.totalorder %s91, %s94
      %p100 = scmp.eq.s32.totalorder %s20, 0
      %p101 = por %p99, %p100
      %p102 = scmp.ne.s32.totalorder %s91, %s94
      %p103 = scmp.eq.s32.totalorder %s25, 3
      %p104 = por %p102, %p103
      %p105 = scmp.ne.s32.totalorder %s94, %s95
      %p106 = scmp.eq.s32.totalorder %s25, 0
      %p107 = por %p105, %p106
      %p108 = scmp.ne.s32.totalorder %s94, %s95
      %p109 = scmp.eq.s32.totalorder %s26, 3
      %p110 = por %p108, %p109
      %p112 = scmp.ne.s32.totalorder %s95, %s111
      %p113 = scmp.eq.s32.totalorder %s26, 0
      %p114 = por %p112, %p113
      %s115 = ssub.s32 %s27, %s39
      %s116 = ssub.s32 %s28, %s35
      %s117 = sor.u32 %s115, %s116
      %p118 = scmp.eq.s32.totalorder %s117, 0
      %s120 = sadd.s32 %s119, 1
      %s121 = scalar_select %p118, %s119, %s120
      %p124 = pneg %p118
      %p125 = scmp.eq.s32.totalorder %s20, 3
      %p126 = por %p124, %p125
      %p127 = scmp.ne.s32.totalorder %s119, %s122
      %p128 = scmp.eq.s32.totalorder %s20, 0
      %p129 = por %p127, %p128
      %p130 = scmp.ne.s32.totalorder %s119, %s122
      %p131 = scmp.eq.s32.totalorder %s25, 3
      %p132 = por %p130, %p131
      %p133 = scmp.ne.s32.totalorder %s122, %s123
      %p134 = scmp.eq.s32.totalorder %s25, 0
      %p135 = por %p133, %p134
      %p136 = scmp.ne.s32.totalorder %s122, %s123
      %p137 = scmp.eq.s32.totalorder %s26, 3
      %p138 = por %p136, %p137
      %p140 = scmp.ne.s32.totalorder %s123, %s139
      %p141 = scmp.eq.s32.totalorder %s26, 0
      %p142 = por %p140, %p141
      %p143 = scmp.le.s32.totalorder 1, %s20
      %p144 = scmp.lt.s32.totalorder %s20, 5
      %p145 = pnand %p143, %p144
      %p146 = pneg %p145
      // Predicated region
      $region9: #{conv_batch_norm.2} parent=5 // pred_check
        _
      $region10: #{conv_batch_norm.2} parent=5 // pred_check_branch
        %148 = sbr.rel (%p145) target = $region12
      $region11: #{conv_batch_norm.2} parent=5 // pred_region
        %s149 = ssub.s32 %s20, 1
        // Predicated region
        $region13: #{conv_batch_norm.2} parent=11 // pred_check
          %p150 = pneg %p79
        $region14: #{conv_batch_norm.2} parent=11 // pred_check_branch
          %152 = sbr.rel (%p150) target = $region16
        $region15: #{conv_batch_norm.2} parent=11 // pred_region
          %s154 = ssub.s32 1728, 1728
          %155 = vsyncadd [#allocation6], %s154
          %s156 = sshll.u32 [#allocation5], 4
          %s157 = int_to_ptr.vmem [resolvable:$true] %s156
          %162 = dma.hbm_to_vmem [thread:$0]  %s1, 1728, %s157, [#allocation6], 64, 64, 4
        $region16: #{conv_batch_norm.2} parent=11 // pred_fallthru
          _
      $region12: #{conv_batch_norm.2} parent=5 // pred_fallthru
        _
      %p163 = scmp.lt.s32.totalorder %s20, 4
      // Predicated region
      $region17: #{conv_batch_norm.2} parent=5 // pred_check
        %p164 = pneg %p163
      $region18: #{conv_batch_norm.2} parent=5 // pred_check_branch
        %166 = sbr.rel (%p164) target = $region20
      $region19: #{conv_batch_norm.2} parent=5 // pred_region
        // Predicated region
        $region21: #{conv_batch_norm.2} parent=19 // pred_check
          %p167 = pneg %p52
        $region22: #{conv_batch_norm.2} parent=19 // pred_check_branch
          %169 = sbr.rel (%p167) target = $region24
        $region23: #{conv_batch_norm.2} parent=19 // pred_region
          %s170 = sand.u32 %s42, 1
          %s171 = scalar_lea.sflag [#allocation3], %s170
          %s172 = sand.u32 %s42, 1
          %s173 = smul.addr %s172, 24
          %s174 = scalar_lea.vmem [#allocation2], %s173
          %s176 = ssub.s32 384, 384
          %177 = vsyncadd %s171, %s176
          %s178 = smul.addr %s27, 3
          %s179 = smul.addr %s178, 128
          %s180 = scalar_lea.hbm %s0, %s179
          %s181 = sshll.u32 %s174, 4
          %s182 = int_to_ptr.vmem [resolvable:$true] %s181
          %187 = dma.hbm_to_vmem [thread:$0]  %s180, 384, %s182, %s171, 128, 128, 8
        $region24: #{conv_batch_norm.2} parent=19 // pred_fallthru
          _
      $region20: #{conv_batch_norm.2} parent=5 // pred_fallthru
        _
      %p188 = scmp.le.s32.totalorder 1, %s20
      %p189 = scmp.lt.s32.totalorder %s20, 5
      %p190 = pnand %p188, %p189
      %p191 = pneg %p190
      // Predicated region
      $region25: #{conv_batch_norm.2} parent=5 // pred_check
        _
      $region26: #{conv_batch_norm.2} parent=5 // pred_check_branch
        %193 = sbr.rel (%p190) target = $region28
      $region27: #{conv_batch_norm.2} parent=5 // pred_region
        %s194 = ssub.s32 %s20, 1
        %s195 = sand.u32 %s45, 1
        %s196 = scalar_lea.sflag [#allocation3], %s195
        %s197 = sand.u32 %s45, 1
        %s198 = smul.addr %s197, 24
        %s199 = scalar_lea.vmem [#allocation2], %s198
        // Predicated region
        $region29: #{conv_batch_norm.2} parent=27 // pred_check
          %p200 = pneg %p58
        $region30: #{conv_batch_norm.2} parent=27 // pred_check_branch
          %202 = sbr.rel (%p200) target = $region32
        $region31: #{conv_batch_norm.2} parent=27 // pred_region
          %203 = dma.done %s196, 384
        $region32: #{conv_batch_norm.2} parent=27 // pred_fallthru
          _
        // Predicated region
        $region33: #{conv_batch_norm.2} parent=27 // pred_check
          %p204 = pneg %p79
        $region34: #{conv_batch_norm.2} parent=27 // pred_check_branch
          %206 = sbr.rel (%p204) target = $region36
        $region35: #{conv_batch_norm.2} parent=27 // pred_region
          %207 = dma.done [#allocation6], 1728
        $region36: #{conv_batch_norm.2} parent=27 // pred_fallthru
          _
        %s208 = sand.u32 %s45, 1
        %s209 = scalar_lea.sflag [#allocation3], %s208
        %s210 = sand.u32 %s45, 1
        %s211 = smul.addr %s210, 24
        %s212 = scalar_lea.vmem [#allocation2], %s211
        %p213 = pneg %p58
        %p214 = pneg %p55
        %p215 = pneg %p79
        %p216 = pneg %p76
        %p217 = pneg %p107
        %p218 = pneg %p104
        %s219 = sand.u32 %s94, 1
        %s220 = scalar_lea.sflag [#allocation4], %s219
        %s221 = sand.u32 %s94, 1
        %s222 = smul.addr %s221, 4
        %s223 = scalar_lea.vmem [#allocation7], %s222
        %p224 = pneg %p135
        %p225 = pneg %p132
        %s226 = sand.u32 %s122, 1
        %s227 = scalar_lea.sflag [#allocation9], %s226
        %s228 = sand.u32 %s122, 1
        %s229 = smul.addr %s228, 2
        %s230 = scalar_lea.vmem [#allocation8], %s229
        %s232 = smul.u32 %s30, 8
        %s233 = scalar_lea.vmem %s199, %s232 [#allocation2]
        %v234 = vld [vmem:[%s233] sm:$0xff]
        %v235 = vld [vmem:[%s233 + $0x8] sm:$0x3]
        %v236 = vpack.c.bf16 %v234, %v234
        %v237 = vld [vmem:[#allocation5] sm:$0xf]
        %v238 = vld [vmem:[#allocation5 + $0x4] sm:$0xf]
        %v239 = vld [vmem:[#allocation5 + $0x8] sm:$0xf]
        %v240 = vld [vmem:[#allocation5 + $0xc] sm:$0xf]
        %v241 = vld [vmem:[#allocation5 + $0x10] sm:$0xf]
        %v242 = vld [vmem:[#allocation5 + $0x14] sm:$0xf]
        %v243 = vld [vmem:[#allocation5 + $0x18] sm:$0xf]
        %v244 = vld [vmem:[#allocation5 + $0x1c] sm:$0xf]
        %v245 = vld [vmem:[#allocation5 + $0x20] sm:$0xf]
        %v246 = vpack.c.bf16 %v235, %v234
        %s247 = scalar_lea.vmem [#allocation5], 36
        %v248 = vld [vmem:[%s247] sm:$0xf]
        %v249 = vld [vmem:[%s247 + $0x4] sm:$0xf]
        %v250 = vld [vmem:[%s247 + $0x8] sm:$0xf]
        %v251 = vld [vmem:[%s247 + $0xc] sm:$0xf]
        %v252 = vld [vmem:[%s247 + $0x10] sm:$0xf]
        %v253 = vld [vmem:[%s247 + $0x14] sm:$0xf]
        %v254 = vld [vmem:[%s247 + $0x18] sm:$0xf]
        %v255 = vld [vmem:[%s247 + $0x1c] sm:$0xf]
        %v256 = vld [vmem:[%s247 + $0x20] sm:$0xf]
        %v258 = vshrl.u32 %v246, 16
        %v260 = vshll.u32 %v246, 16
        %v262 = vrot.slane %v260, 1
        %v263 = vor.u32 %v258, %v262
        %v273 = vunpack.c.l.b16 %v248
        %v274 = vunpack.c.l.b16 %v249
        %v275 = vunpack.c.l.b16 %v250
        %v276 = vunpack.c.l.b16 %v251
        %v277 = vunpack.c.l.b16 %v252
        %v278 = vunpack.c.l.b16 %v253
        %v279 = vunpack.c.l.b16 %v254
        %v280 = vunpack.c.l.b16 %v255
        %v281 = vunpack.c.l.b16 %v256
        %v282 = vpack.c.b16 %v274, %v273
        %v283 = vpack.c.b16 %v276, %v275
        %v284 = vpack.c.b16 %v278, %v277
        %v285 = vpack.c.b16 %v280, %v279
        %v286 = vpack.c.b16 %v281, %v281
        %vm291 = vcmask 588800
        %v293 = vsel %vm291, %v263, 0
        %vm295 = vcmask 1043456
        %v297 = vsel %vm295, %v286, 0
        %299 = vmatprep.subr.bf16.mxu0 0
        %300 = vmatpush1.bf16.msra.mxu0 %v282
        %301 = vmatprep.subr.bf16.mxu0 0
        %302 = vmatpush1.bf16.msra.mxu0 %v283
        %303 = vmatprep.subr.bf16.mxu0 0
        %304 = vmatpush1.bf16.msra.mxu0 %v284
        %305 = vmatprep.subr.bf16.mxu0 0
        %306 = vmatpush1.bf16.msra.mxu0 %v285
        %307 = vmatprep.subr.bf16.mxu0 0
        %308 = vmatpush1.bf16.msra.mxu0 %v297
        %309 = vmatprep.subr.bf16.mxu0 0
        %310 = vmatpush1.bf16.msra.mxu0 0
        %311 = vmatprep.subr.bf16.mxu0 0
        %312 = vmatpush1.bf16.msra.mxu0 0
        %313 = vmatprep.subr.bf16.mxu0 0
        %314 = vmatpush1.bf16.msra.mxu0 0
        %315 = vmatprep.subr.bf16.mxu0 0
        %316 = vmatpush1.bf16.msra.mxu0 0
        %317 = vmatprep.subr.bf16.mxu0 0
        %318 = vmatpush1.bf16.msra.mxu0 0
        %319 = vmatprep.subr.bf16.mxu0 0
        %320 = vmatpush1.bf16.msra.mxu0 0
        %321 = vmatprep.subr.bf16.mxu0 0
        %322 = vmatpush1.bf16.msra.mxu0 0
        %323 = vmatprep.subr.bf16.mxu0 0
        %324 = vmatpush1.bf16.msra.mxu0 0
        %325 = vmatprep.subr.bf16.mxu0 0
        %326 = vmatpush1.bf16.msra.mxu0 0
        %327 = vmatprep.subr.bf16.mxu0 0
        %328 = vmatpush1.bf16.msra.mxu0 0
        %329 = vmatprep.subr.bf16.mxu0 0
        %330 = vmatpush1.bf16.msra.mxu0 0
        %331 = vmatprep.mubr.bf16.mxu0 0
        %332 = vmatmul.mubr.bf16.gmra.mrb[0].mxu0 %v293
        %v333 = vpop.f32.mrb[0].mxu0
        %v334 = vadd.f32 0.0, %v333
        %v335 = vpop.f32.mrb[0].mxu0
        %v336 = vpop.f32.mrb[0].mxu0
        %v337 = vpop.f32.mrb[0].mxu0
        %338 = vdwg.mxu0
        %v348 = vunpack.c.l.b16 %v237
        %v349 = vunpack.c.l.b16 %v238
        %v350 = vunpack.c.l.b16 %v239
        %v351 = vunpack.c.l.b16 %v240
        %v352 = vunpack.c.l.b16 %v241
        %v353 = vunpack.c.l.b16 %v242
        %v354 = vunpack.c.l.b16 %v243
        %v355 = vunpack.c.l.b16 %v244
        %v356 = vunpack.c.l.b16 %v245
        %v357 = vpack.c.b16 %v349, %v348
        %v358 = vpack.c.b16 %v351, %v350
        %v359 = vpack.c.b16 %v353, %v352
        %v360 = vpack.c.b16 %v355, %v354
        %v361 = vpack.c.b16 %v356, %v356
        %v367 = vsel %vm291, %v236, 0
        %v370 = vsel %vm295, %v361, 0
        %372 = vmatprep.subr.bf16.mxu0 0
        %373 = vmatpush1.bf16.msra.mxu0 %v357
        %374 = vmatprep.subr.bf16.mxu0 0
        %375 = vmatpush1.bf16.msra.mxu0 %v358
        %376 = vmatprep.subr.bf16.mxu0 0
        %377 = vmatpush1.bf16.msra.mxu0 %v359
        %378 = vmatprep.subr.bf16.mxu0 0
        %379 = vmatpush1.bf16.msra.mxu0 %v360
        %380 = vmatprep.subr.bf16.mxu0 0
        %381 = vmatpush1.bf16.msra.mxu0 %v370
        %382 = vmatprep.subr.bf16.mxu0 0
        %383 = vmatpush1.bf16.msra.mxu0 0
        %384 = vmatprep.subr.bf16.mxu0 0
        %385 = vmatpush1.bf16.msra.mxu0 0
        %386 = vmatprep.subr.bf16.mxu0 0
        %387 = vmatpush1.bf16.msra.mxu0 0
        %388 = vmatprep.subr.bf16.mxu0 0
        %389 = vmatpush1.bf16.msra.mxu0 0
        %390 = vmatprep.subr.bf16.mxu0 0
        %391 = vmatpush1.bf16.msra.mxu0 0
        %392 = vmatprep.subr.bf16.mxu0 0
        %393 = vmatpush1.bf16.msra.mxu0 0
        %394 = vmatprep.subr.bf16.mxu0 0
        %395 = vmatpush1.bf16.msra.mxu0 0
        %396 = vmatprep.subr.bf16.mxu0 0
        %397 = vmatpush1.bf16.msra.mxu0 0
        %398 = vmatprep.subr.bf16.mxu0 0
        %399 = vmatpush1.bf16.msra.mxu0 0
        %400 = vmatprep.subr.bf16.mxu0 0
        %401 = vmatpush1.bf16.msra.mxu0 0
        %402 = vmatprep.subr.bf16.mxu0 0
        %403 = vmatpush1.bf16.msra.mxu0 0
        %404 = vmatprep.mubr.bf16.mxu0 0
        %405 = vmatmul.mubr.bf16.gmra.mrb[0].mxu0 %v367
        %v406 = vpop.f32.mrb[0].mxu0
        %v407 = vadd.f32 %v334, %v406
        %v408 = vpop.f32.mrb[0].mxu0
        %v409 = vpop.f32.mrb[0].mxu0
        %v410 = vpop.f32.mrb[0].mxu0
        %411 = vdwg.mxu0
        %s412 = scalar_lea.vmem [#allocation5], 72
        %v413 = vld [vmem:[%s412] sm:$0xf]
        %v414 = vld [vmem:[%s412 + $0x4] sm:$0xf]
        %v415 = vld [vmem:[%s412 + $0x8] sm:$0xf]
        %v416 = vld [vmem:[%s412 + $0xc] sm:$0xf]
        %v417 = vld [vmem:[%s412 + $0x10] sm:$0xf]
        %v418 = vld [vmem:[%s412 + $0x14] sm:$0xf]
        %v419 = vld [vmem:[%s412 + $0x18] sm:$0xf]
        %v420 = vld [vmem:[%s412 + $0x1c] sm:$0xf]
        %v421 = vld [vmem:[%s412 + $0x20] sm:$0xf]
        %v423 = vrot.slane %v246, 1
        %v433 = vunpack.c.l.b16 %v413
        %v434 = vunpack.c.l.b16 %v414
        %v435 = vunpack.c.l.b16 %v415
        %v436 = vunpack.c.l.b16 %v416
        %v437 = vunpack.c.l.b16 %v417
        %v438 = vunpack.c.l.b16 %v418
        %v439 = vunpack.c.l.b16 %v419
        %v440 = vunpack.c.l.b16 %v420
        %v441 = vunpack.c.l.b16 %v421
        %v442 = vpack.c.b16 %v434, %v433
        %v443 = vpack.c.b16 %v436, %v435
        %v444 = vpack.c.b16 %v438, %v437
        %v445 = vpack.c.b16 %v440, %v439
        %v446 = vpack.c.b16 %v441, %v441
        %v452 = vsel %vm291, %v423, 0
        %v455 = vsel %vm295, %v446, 0
        %457 = vmatprep.subr.bf16.mxu0 0
        %458 = vmatpush1.bf16.msra.mxu0 %v442
        %459 = vmatprep.subr.bf16.mxu0 0
        %460 = vmatpush1.bf16.msra.mxu0 %v443
        %461 = vmatprep.subr.bf16.mxu0 0
        %462 = vmatpush1.bf16.msra.mxu0 %v444
        %463 = vmatprep.subr.bf16.mxu0 0
        %464 = vmatpush1.bf16.msra.mxu0 %v445
        %465 = vmatprep.subr.bf16.mxu0 0
        %466 = vmatpush1.bf16.msra.mxu0 %v455
        %467 = vmatprep.subr.bf16.mxu0 0
        %468 = vmatpush1.bf16.msra.mxu0 0
        %469 = vmatprep.subr.bf16.mxu0 0
        %470 = vmatpush1.bf16.msra.mxu0 0
        %471 = vmatprep.subr.bf16.mxu0 0
        %472 = vmatpush1.bf16.msra.mxu0 0
        %473 = vmatprep.subr.bf16.mxu0 0
        %474 = vmatpush1.bf16.msra.mxu0 0
        %475 = vmatprep.subr.bf16.mxu0 0
        %476 = vmatpush1.bf16.msra.mxu0 0
        %477 = vmatprep.subr.bf16.mxu0 0
        %478 = vmatpush1.bf16.msra.mxu0 0
        %479 = vmatprep.subr.bf16.mxu0 0
        %480 = vmatpush1.bf16.msra.mxu0 0
        %481 = vmatprep.subr.bf16.mxu0 0
        %482 = vmatpush1.bf16.msra.mxu0 0
        %483 = vmatprep.subr.bf16.mxu0 0
        %484 = vmatpush1.bf16.msra.mxu0 0
        %485 = vmatprep.subr.bf16.mxu0 0
        %486 = vmatpush1.bf16.msra.mxu0 0
        %487 = vmatprep.subr.bf16.mxu0 0
        %488 = vmatpush1.bf16.msra.mxu0 0
        %489 = vmatprep.mubr.bf16.mxu0 0
        %490 = vmatmul.mubr.bf16.gmra.mrb[0].mxu0 %v452
        %v491 = vpop.f32.mrb[0].mxu0
        %v492 = vadd.f32 0.0, %v491
        %v493 = vpop.f32.mrb[0].mxu0
        %v494 = vpop.f32.mrb[0].mxu0
        %v495 = vpop.f32.mrb[0].mxu0
        %496 = vdwg.mxu0
        %v497 = vadd.f32 %v407, %v492
        %v498 = vpack.c.bf16 %v497, %v497
        %499 = vst [vmem:[%s223] sm:$0xf] %v498
        %v500 = vrot.slane %v497, 4
        %v501 = vadd.f32 %v497, %v500
        %v502 = vrot.slane %v501, 2
        %v503 = vadd.f32 %v501, %v502
        %v504 = vrot.slane %v503, 1
        %v505 = vadd.f32 %v503, %v504
        %v506 = vmul.f32 %v497, %v497
        %v507 = vrot.slane %v506, 4
        %v508 = vadd.f32 %v506, %v507
        %v509 = vrot.slane %v508, 2
        %v510 = vadd.f32 %v508, %v509
        %v511 = vrot.slane %v510, 1
        %v512 = vadd.f32 %v510, %v511
        %vm513 = vcmask 1040384
        %v514 = vsel %vm513, %v505, %v512
        %515 = vst [vmem:[%s230] sm:$0x3] %v514
        %s516 = sand.u32 %s94, 1
        %s517 = scalar_lea.sflag [#allocation4], %s516
        %s518 = sand.u32 %s94, 1
        %s519 = smul.addr %s518, 4
        %s520 = scalar_lea.vmem [#allocation7], %s519
        %s521 = sand.u32 %s122, 1
        %s522 = scalar_lea.sflag [#allocation9], %s521
        %s523 = sand.u32 %s122, 1
        %s524 = smul.addr %s523, 2
        %s525 = scalar_lea.vmem [#allocation8], %s524
        // Predicated region
        $region37: #{conv_batch_norm.2} parent=27 // pred_check
          %p526 = pneg %p104
        $region38: #{conv_batch_norm.2} parent=27 // pred_check_branch
          %528 = sbr.rel (%p526) target = $region40
        $region39: #{conv_batch_norm.2} parent=27 // pred_region
          %s530 = ssub.s32 64, 64
          %531 = vsyncadd %s517, %s530
          %s532 = smul.addr %s29, 2
          %s533 = sadd.s32 %s30, %s532
          %s534 = smul.addr %s533, 64
          %s535 = scalar_lea.hbm %s2, %s534
          %s537 = sshll.u32 %s520, 4
          %s538 = int_to_ptr.vmem [resolvable:$true] %s537
          %540 = dma.vmem_to_hbm [thread:$0]  %s538, 64, %s535, %s517
        $region40: #{conv_batch_norm.2} parent=27 // pred_fallthru
          _
        // Predicated region
        $region41: #{conv_batch_norm.2} parent=27 // pred_check
          %p541 = pneg %p132
        $region42: #{conv_batch_norm.2} parent=27 // pred_check_branch
          %543 = sbr.rel (%p541) target = $region44
        $region43: #{conv_batch_norm.2} parent=27 // pred_region
          %s545 = ssub.s32 32, 32
          %546 = vsyncadd %s522, %s545
          %s547 = smul.addr %s29, 2
          %s548 = sadd.s32 %s30, %s547
          %s549 = smul.addr %s548, 32
          %s550 = scalar_lea.hbm %s3, %s549
          %s552 = sshll.u32 %s525, 4
          %s553 = int_to_ptr.vmem [resolvable:$true] %s552
          %555 = dma.vmem_to_hbm [thread:$0]  %s553, 32, %s550, %s522
        $region44: #{conv_batch_norm.2} parent=27 // pred_fallthru
          _
      $region28: #{conv_batch_norm.2} parent=5 // pred_fallthru
        _
      %p556 = scmp.le.s32.totalorder 2, %s20
      // Predicated region
      $region45: #{conv_batch_norm.2} parent=5 // pred_check
        %p557 = pneg %p556
      $region46: #{conv_batch_norm.2} parent=5 // pred_check_branch
        %559 = sbr.rel (%p557) target = $region48
      $region47: #{conv_batch_norm.2} parent=5 // pred_region
        %s560 = ssub.s32 %s20, 2
        // Predicated region
        $region49: #{conv_batch_norm.2} parent=47 // pred_check
          %p561 = pneg %p110
        $region50: #{conv_batch_norm.2} parent=47 // pred_check_branch
          %563 = sbr.rel (%p561) target = $region52
        $region51: #{conv_batch_norm.2} parent=47 // pred_region
          %s564 = sand.u32 %s95, 1
          %s565 = scalar_lea.sflag [#allocation4], %s564
          %s566 = sand.u32 %s95, 1
          %s567 = smul.addr %s566, 4
          %s568 = scalar_lea.vmem [#allocation7], %s567
          %569 = dma.done %s565, 64
        $region52: #{conv_batch_norm.2} parent=47 // pred_fallthru
          _
        // Predicated region
        $region53: #{conv_batch_norm.2} parent=47 // pred_check
          %p570 = pneg %p138
        $region54: #{conv_batch_norm.2} parent=47 // pred_check_branch
          %572 = sbr.rel (%p570) target = $region56
        $region55: #{conv_batch_norm.2} parent=47 // pred_region
          %s573 = sand.u32 %s123, 1
          %s574 = scalar_lea.sflag [#allocation9], %s573
          %s575 = sand.u32 %s123, 1
          %s576 = smul.addr %s575, 2
          %s577 = scalar_lea.vmem [#allocation8], %s576
          %578 = dma.done %s574, 32
        $region56: #{conv_batch_norm.2} parent=47 // pred_fallthru
          _
      $region48: #{conv_batch_norm.2} parent=5 // pred_fallthru
        _
    $region6: #{conv_batch_norm.2} parent=1 // loop_footer
      %s24 = sadd.s32 1, %s20
    $region7: #{conv_batch_norm.2} parent=1 // loop_footer_branch
      %19 = sbr.rel target = $region3
    $region8: #{conv_batch_norm.2} parent=1 // loop_exit
      _
    %579 = vsyncpa [#allocation3], 1
    %s580 = scalar_lea.sflag [#allocation3], 1
    %581 = vsyncpa %s580, 1
    %582 = vsyncpa [#allocation6], 1
    %583 = vsyncpa [#allocation4], 1
    %s584 = scalar_lea.sflag [#allocation4], 1
    %585 = vsyncpa %s584, 1
    %586 = vsyncpa [#allocation9], 1
    %s587 = scalar_lea.sflag [#allocation9], 1
    %588 = vsyncpa %s587, 1

// kernel: conv_batch_norm.3
$region0: #{conv_batch_norm.3}
  #allocation0 [shape = 'u32[]', space=smem, size = 0x4, offset = 0x4, fixed_abs, tag = 'smem constant byte address 0x4 - core index']
  #allocation1 [shape = 'u32[144,128]{1,0:T(1,128)}', space=vmem, size = 0x12000, scoped, tag = 'internal scratch']
  %s0 = inlined_call_operand.hbm [shape: bf16[2,16,128], index: 0, kind: input, shape index: {}]
  %s1 = inlined_call_operand.hbm [shape: f32[1,1,128], index: 1, kind: input, shape index: {}]
  %s2 = inlined_call_operand.hbm [shape: f32[1,1,128], index: 2, kind: input, shape index: {}]
  %s3 = inlined_call_operand.hbm [shape: f32[2,16,128], index: 3, kind: output, shape index: {}]
  %s4 = sld [smem:[#allocation0]]
  $region57: #{conv_batch_norm.3} parent=0
    _
  %s6 = ssub.s32 1, %s4
  %s7 = scalar_select 0, %s6, %s4
  $region1: #{conv_batch_norm.3} parent=0
    #allocation2 [shape = 'u8[4096]{0}', space=vmem, size = 0x1000, scoped, tag = 'input window, operand 0']
    #allocation3 [shape = 's32[2]{0}', space=sflag, size = 0x8, scoped, tag = 'scoped memory for conv_batch_norm.3']
    #allocation4 [shape = 's32[2]{0}', space=sflag, size = 0x8, scoped, tag = 'scoped memory for conv_batch_norm.3']
    #allocation5 [shape = 'u8[512]{0}', space=vmem, size = 0x400, scoped, tag = 'input window, operand 1, single buffered']
    #allocation6 [shape = 's32[1]{0}', space=sflag, size = 0x4, scoped, tag = 'scoped memory for conv_batch_norm.3']
    #allocation7 [shape = 'u8[512]{0}', space=vmem, size = 0x400, scoped, tag = 'input window, operand 2, single buffered']
    #allocation8 [shape = 'u8[8192]{0}', space=vmem, size = 0x2000, scoped, tag = 'output window, operand 0']
    %8 = vsyncpa [#allocation3], 0
    %s9 = scalar_lea.sflag [#allocation3], 1
    %10 = vsyncpa %s9, 0
    %11 = vsyncpa [#allocation6], 0
    %12 = vsyncpa [#allocation4], 0
    %s13 = scalar_lea.sflag [#allocation4], 1
    %14 = vsyncpa %s13, 0
    loop: start=0, step=1, limit=6
    $region2: #{conv_batch_norm.3} parent=1 // loop_pre_header
      _
    $region3: #{conv_batch_norm.3} parent=1 // loop_header
      %s16 = sphi 0, %s20
      %p17 = scmp.ge.s32.totalorder %s16, 6
      %s23 = sphi 0, %s35
      %s24 = sphi 0, %s31
      %s25 = sphi 0, %s23
      %s26 = sphi 0, %s24
      %s27 = sphi 0, %s25
      %s28 = sphi 0, %s26
      %s40 = sphi 0, %s42
      %s43 = sphi 0, %s40
      %s44 = sphi 0, %s43
      %s60 = sphi 0, %s44
      %s64 = sphi 0, %s64
      %s66 = sphi 0, %s64
      %s67 = sphi 0, %s66
      %s81 = sphi 0, %s67
      %s85 = sphi 0, %s85
      %s87 = sphi 0, %s85
      %s88 = sphi 0, %s87
      %s102 = sphi 0, %s88
      %s110 = sphi 0, %s112
      %s113 = sphi 0, %s110
      %s114 = sphi 0, %s113
      %s130 = sphi 0, %s114
    $region4: #{conv_batch_norm.3} parent=1 // loop_header_branch
      %19 = sbr.rel (%p17) target = $region8
    $region5: #{conv_batch_norm.3} parent=1 // loop_body
      %s21 = ssub.s32 %s16, 1
      %s22 = ssub.s32 %s16, 2
      %s29 = sadd.s32 1, %s24
      %p30 = scmp.ge.s32.totalorder %s29, 2
      %s31 = scalar_select %p30, 0, %s29
      %s32 = sadd.s32 1, %s23
      %s33 = scalar_select %p30, %s32, %s23
      %p34 = scmp.ge.s32.totalorder %s33, 2
      %s35 = scalar_select %p34, 0, %s33
      %s36 = ssub.s32 %s23, %s35
      %s37 = ssub.s32 %s24, %s31
      %s38 = sor.u32 %s36, %s37
      %p39 = scmp.eq.s32.totalorder %s38, 0
      %s41 = sadd.s32 %s40, 1
      %s42 = scalar_select %p39, %s40, %s41
      %p45 = pneg %p39
      %p46 = scmp.eq.s32.totalorder %s16, 3
      %p47 = por %p45, %p46
      %p48 = scmp.ne.s32.totalorder %s40, %s43
      %p49 = scmp.eq.s32.totalorder %s16, 0
      %p50 = por %p48, %p49
      %p51 = scmp.ne.s32.totalorder %s40, %s43
      %p52 = scmp.eq.s32.totalorder %s21, 3
      %p53 = por %p51, %p52
      %p54 = scmp.ne.s32.totalorder %s43, %s44
      %p55 = scmp.eq.s32.totalorder %s21, 0
      %p56 = por %p54, %p55
      %p57 = scmp.ne.s32.totalorder %s43, %s44
      %p58 = scmp.eq.s32.totalorder %s22, 3
      %p59 = por %p57, %p58
      %p61 = scmp.ne.s32.totalorder %s44, %s60
      %p62 = scmp.eq.s32.totalorder %s22, 0
      %p63 = por %p61, %p62
      %s65 = sadd.s32 %s64, 1
      %p68 = scmp.eq.s32.totalorder %s16, 3
      %p69 = scmp.ne.s32.totalorder %s64, %s66
      %p70 = scmp.eq.s32.totalorder %s16, 0
      %p71 = por %p69, %p70
      %p72 = scmp.ne.s32.totalorder %s64, %s66
      %p73 = scmp.eq.s32.totalorder %s21, 3
      %p74 = por %p72, %p73
      %p75 = scmp.ne.s32.totalorder %s66, %s67
      %p76 = scmp.eq.s32.totalorder %s21, 0
      %p77 = por %p75, %p76
      %p78 = scmp.ne.s32.totalorder %s66, %s67
      %p79 = scmp.eq.s32.totalorder %s22, 3
      %p80 = por %p78, %p79
      %p82 = scmp.ne.s32.totalorder %s67, %s81
      %p83 = scmp.eq.s32.totalorder %s22, 0
      %p84 = por %p82, %p83
      %s86 = sadd.s32 %s85, 1
      %p89 = scmp.eq.s32.totalorder %s16, 3
      %p90 = scmp.ne.s32.totalorder %s85, %s87
      %p91 = scmp.eq.s32.totalorder %s16, 0
      %p92 = por %p90, %p91
      %p93 = scmp.ne.s32.totalorder %s85, %s87
      %p94 = scmp.eq.s32.totalorder %s21, 3
      %p95 = por %p93, %p94
      %p96 = scmp.ne.s32.totalorder %s87, %s88
      %p97 = scmp.eq.s32.totalorder %s21, 0
      %p98 = por %p96, %p97
      %p99 = scmp.ne.s32.totalorder %s87, %s88
      %p100 = scmp.eq.s32.totalorder %s22, 3
      %p101 = por %p99, %p100
      %p103 = scmp.ne.s32.totalorder %s88, %s102
      %p104 = scmp.eq.s32.totalorder %s22, 0
      %p105 = por %p103, %p104
      %s106 = ssub.s32 %s23, %s35
      %s107 = ssub.s32 %s24, %s31
      %s108 = sor.u32 %s106, %s107
      %p109 = scmp.eq.s32.totalorder %s108, 0
      %s111 = sadd.s32 %s110, 1
      %s112 = scalar_select %p109, %s110, %s111
      %p115 = pneg %p109
      %p116 = scmp.eq.s32.totalorder %s16, 3
      %p117 = por %p115, %p116
      %p118 = scmp.ne.s32.totalorder %s110, %s113
      %p119 = scmp.eq.s32.totalorder %s16, 0
      %p120 = por %p118, %p119
      %p121 = scmp.ne.s32.totalorder %s110, %s113
      %p122 = scmp.eq.s32.totalorder %s21, 3
      %p123 = por %p121, %p122
      %p124 = scmp.ne.s32.totalorder %s113, %s114
      %p125 = scmp.eq.s32.totalorder %s21, 0
      %p126 = por %p124, %p125
      %p127 = scmp.ne.s32.totalorder %s113, %s114
      %p128 = scmp.eq.s32.totalorder %s22, 3
      %p129 = por %p127, %p128
      %p131 = scmp.ne.s32.totalorder %s114, %s130
      %p132 = scmp.eq.s32.totalorder %s22, 0
      %p133 = por %p131, %p132
      %p134 = scmp.le.s32.totalorder 1, %s16
      %p135 = scmp.lt.s32.totalorder %s16, 5
      %p136 = pnand %p134, %p135
      %p137 = pneg %p136
      // Predicated region
      $region9: #{conv_batch_norm.3} parent=5 // pred_check
        _
      $region10: #{conv_batch_norm.3} parent=5 // pred_check_branch
        %139 = sbr.rel (%p136) target = $region12
      $region11: #{conv_batch_norm.3} parent=5 // pred_region
        %s140 = ssub.s32 %s16, 1
        // Predicated region
        $region13: #{conv_batch_norm.3} parent=11 // pred_check
          %p141 = pneg %p77
        $region14: #{conv_batch_norm.3} parent=11 // pred_check_branch
          %143 = sbr.rel (%p141) target = $region16
        $region15: #{conv_batch_norm.3} parent=11 // pred_region
          %s145 = ssub.s32 16, 16
          %146 = vsyncadd [#allocation6], %s145
          %s148 = sshll.u32 [#allocation5], 4
          %s149 = int_to_ptr.vmem [resolvable:$true] %s148
          %151 = dma.hbm_to_vmem [thread:$0]  %s1, 16, %s149, [#allocation6]
        $region16: #{conv_batch_norm.3} parent=11 // pred_fallthru
          _
        // Predicated region
        $region17: #{conv_batch_norm.3} parent=11 // pred_check
          %p152 = pneg %p98
        $region18: #{conv_batch_norm.3} parent=11 // pred_check_branch
          %154 = sbr.rel (%p152) target = $region20
        $region19: #{conv_batch_norm.3} parent=11 // pred_region
          %s156 = ssub.s32 16, 16
          %157 = vsyncadd [#allocation6], %s156
          %s159 = sshll.u32 [#allocation7], 4
          %s160 = int_to_ptr.vmem [resolvable:$true] %s159
          %162 = dma.hbm_to_vmem [thread:$0]  %s2, 16, %s160, [#allocation6]
        $region20: #{conv_batch_norm.3} parent=11 // pred_fallthru
          _
      $region12: #{conv_batch_norm.3} parent=5 // pred_fallthru
        _
      %p163 = scmp.lt.s32.totalorder %s16, 4
      // Predicated region
      $region21: #{conv_batch_norm.3} parent=5 // pred_check
        %p164 = pneg %p163
      $region22: #{conv_batch_norm.3} parent=5 // pred_check_branch
        %166 = sbr.rel (%p164) target = $region24
      $region23: #{conv_batch_norm.3} parent=5 // pred_region
        // Predicated region
        $region25: #{conv_batch_norm.3} parent=23 // pred_check
          %p167 = pneg %p50
        $region26: #{conv_batch_norm.3} parent=23 // pred_check_branch
          %169 = sbr.rel (%p167) target = $region28
        $region27: #{conv_batch_norm.3} parent=23 // pred_region
          %s170 = sand.u32 %s40, 1
          %s171 = scalar_lea.sflag [#allocation3], %s170
          %s172 = sand.u32 %s40, 1
          %s173 = smul.addr %s172, 4
          %s174 = scalar_lea.vmem [#allocation2], %s173
          %s176 = ssub.s32 64, 64
          %177 = vsyncadd %s171, %s176
          %s178 = smul.addr %s23, 2
          %s179 = sadd.s32 %s24, %s178
          %s180 = smul.addr %s179, 64
          %s181 = scalar_lea.hbm %s0, %s180
          %s183 = sshll.u32 %s174, 4
          %s184 = int_to_ptr.vmem [resolvable:$true] %s183
          %186 = dma.hbm_to_vmem [thread:$0]  %s181, 64, %s184, %s171
        $region28: #{conv_batch_norm.3} parent=23 // pred_fallthru
          _
      $region24: #{conv_batch_norm.3} parent=5 // pred_fallthru
        _
      %p187 = scmp.le.s32.totalorder 1, %s16
      %p188 = scmp.lt.s32.totalorder %s16, 5
      %p189 = pnand %p187, %p188
      %p190 = pneg %p189
      // Predicated region
      $region29: #{conv_batch_norm.3} parent=5 // pred_check
        _
      $region30: #{conv_batch_norm.3} parent=5 // pred_check_branch
        %192 = sbr.rel (%p189) target = $region32
      $region31: #{conv_batch_norm.3} parent=5 // pred_region
        %s193 = ssub.s32 %s16, 1
        %s194 = sand.u32 %s43, 1
        %s195 = scalar_lea.sflag [#allocation3], %s194
        %s196 = sand.u32 %s43, 1
        %s197 = smul.addr %s196, 4
        %s198 = scalar_lea.vmem [#allocation2], %s197
        // Predicated region
        $region33: #{conv_batch_norm.3} parent=31 // pred_check
          %p199 = pneg %p56
        $region34: #{conv_batch_norm.3} parent=31 // pred_check_branch
          %201 = sbr.rel (%p199) target = $region36
        $region35: #{conv_batch_norm.3} parent=31 // pred_region
          %202 = dma.done %s195, 64
        $region36: #{conv_batch_norm.3} parent=31 // pred_fallthru
          _
        // Predicated region
        $region37: #{conv_batch_norm.3} parent=31 // pred_check
          %p203 = pneg %p77
        $region38: #{conv_batch_norm.3} parent=31 // pred_check_branch
          %205 = sbr.rel (%p203) target = $region40
        $region39: #{conv_batch_norm.3} parent=31 // pred_region
          %206 = dma.done [#allocation6], 16
        $region40: #{conv_batch_norm.3} parent=31 // pred_fallthru
          _
        // Predicated region
        $region41: #{conv_batch_norm.3} parent=31 // pred_check
          %p207 = pneg %p98
        $region42: #{conv_batch_norm.3} parent=31 // pred_check_branch
          %209 = sbr.rel (%p207) target = $region44
        $region43: #{conv_batch_norm.3} parent=31 // pred_region
          %210 = dma.done [#allocation6], 16
        $region44: #{conv_batch_norm.3} parent=31 // pred_fallthru
          _
        %s211 = sand.u32 %s43, 1
        %s212 = scalar_lea.sflag [#allocation3], %s211
        %s213 = sand.u32 %s43, 1
        %s214 = smul.addr %s213, 4
        %s215 = scalar_lea.vmem [#allocation2], %s214
        %p216 = pneg %p56
        %p217 = pneg %p53
        %p218 = pneg %p77
        %p219 = pneg %p74
        %p220 = pneg %p98
        %p221 = pneg %p95
        %p222 = pneg %p126
        %p223 = pneg %p123
        %s224 = sand.u32 %s113, 1
        %s225 = scalar_lea.sflag [#allocation4], %s224
        %s226 = sand.u32 %s113, 1
        %s227 = smul.addr %s226, 8
        %s228 = scalar_lea.vmem [#allocation8], %s227
        %v229 = vld [vmem:[%s198] sm:$0xf]
        %v230 = vunpack.c.l.bf16 %v229
        %v231 = vld [vmem:[#allocation5] sm:$0x1]
        %v233 = vlaneseq
        %v234 = vshrl.u32 %v233, 7
        %v235 = vsub.s32 0, %v234
        %v236 = vrot.slane %v231, %v235
        %v238 = vmul.f32 %v230, %v236
        %v239 = vld [vmem:[#allocation7] sm:$0x1]
        %v241 = vlaneseq
        %v242 = vshrl.u32 %v241, 7
        %v243 = vsub.s32 0, %v242
        %v244 = vrot.slane %v239, %v243
        %v246 = vadd.f32 %v238, %v244
        %v247 = vmax.f32 %v246, 0.0
        %248 = vst [vmem:[%s228] sm:$0xff] %v247
        %s249 = sand.u32 %s113, 1
        %s250 = scalar_lea.sflag [#allocation4], %s249
        %s251 = sand.u32 %s113, 1
        %s252 = smul.addr %s251, 8
        %s253 = scalar_lea.vmem [#allocation8], %s252
        // Predicated region
        $region45: #{conv_batch_norm.3} parent=31 // pred_check
          %p254 = pneg %p123
        $region46: #{conv_batch_norm.3} parent=31 // pred_check_branch
          %256 = sbr.rel (%p254) target = $region48
        $region47: #{conv_batch_norm.3} parent=31 // pred_region
          %s258 = ssub.s32 128, 128
          %259 = vsyncadd %s250, %s258
          %s260 = smul.addr %s25, 2
          %s261 = sadd.s32 %s26, %s260
          %s262 = smul.addr %s261, 128
          %s263 = scalar_lea.hbm %s3, %s262
          %s265 = sshll.u32 %s253, 4
          %s266 = int_to_ptr.vmem [resolvable:$true] %s265
          %268 = dma.vmem_to_hbm [thread:$0]  %s266, 128, %s263, %s250
        $region48: #{conv_batch_norm.3} parent=31 // pred_fallthru
          _
      $region32: #{conv_batch_norm.3} parent=5 // pred_fallthru
        _
      %p269 = scmp.le.s32.totalorder 2, %s16
      // Predicated region
      $region49: #{conv_batch_norm.3} parent=5 // pred_check
        %p270 = pneg %p269
      $region50: #{conv_batch_norm.3} parent=5 // pred_check_branch
        %272 = sbr.rel (%p270) target = $region52
      $region51: #{conv_batch_norm.3} parent=5 // pred_region
        %s273 = ssub.s32 %s16, 2
        // Predicated region
        $region53: #{conv_batch_norm.3} parent=51 // pred_check
          %p274 = pneg %p129
        $region54: #{conv_batch_norm.3} parent=51 // pred_check_branch
          %276 = sbr.rel (%p274) target = $region56
        $region55: #{conv_batch_norm.3} parent=51 // pred_region
          %s277 = sand.u32 %s114, 1
          %s278 = scalar_lea.sflag [#allocation4], %s277
          %s279 = sand.u32 %s114, 1
          %s280 = smul.addr %s279, 8
          %s281 = scalar_lea.vmem [#allocation8], %s280
          %282 = dma.done %s278, 128
        $region56: #{conv_batch_norm.3} parent=51 // pred_fallthru
          _
      $region52: #{conv_batch_norm.3} parent=5 // pred_fallthru
        _
    $region6: #{conv_batch_norm.3} parent=1 // loop_footer
      %s20 = sadd.s32 1, %s16
    $region7: #{conv_batch_norm.3} parent=1 // loop_footer_branch
      %15 = sbr.rel target = $region3
    $region8: #{conv_batch_norm.3} parent=1 // loop_exit
      _
    %283 = vsyncpa [#allocation3], 1
    %s284 = scalar_lea.sflag [#allocation3], 1
    %285 = vsyncpa %s284, 1
    %286 = vsyncpa [#allocation6], 1
    %287 = vsyncpa [#allocation4], 1
    %s288 = scalar_lea.sflag [#allocation4], 1
    %289 = vsyncpa %s288, 1

</llo_original>
